<compile_context>
chip_gen: v7x
topology: tpu7x:2x2x1
jax: 0.10.0
libtpu: 0.0.40
codegen_flags: <defaults>
</compile_context>

<pallas_src>
import functools

import jax
import jax.numpy as jnp
from jax.experimental import pallas as pl
from jax.experimental.pallas import tpu as pltpu

_LANES = 128
_SUBLANES = 8
# 2048 rows * 128 lanes * 4 B = 1 MiB per input per buffer.
_TILE_R_MAX = 2048


def _l1_sum_kernel(p_ref, t_ref, out_ref, acc_ref, *,
                   rows, tiles_total, n_inner, tail_partial, has_phantom):
    """Accumulates sum(|p - t|) over the tiles of one parallel chunk.

    p_ref, t_ref : VMEM (tile_r, 128) input blocks
    out_ref      : VMEM (1, 8, 128) f32 per-chunk partial sums
    acc_ref      : VMEM (8, 128) f32 scratch accumulator
    """
    p_id = pl.program_id(0)
    t_id = pl.program_id(1)

    @pl.when(t_id == 0)
    def _init():
        acc_ref[...] = jnp.zeros_like(acc_ref)

    tile_r = p_ref.shape[0]
    blk = p_id * n_inner + t_id          # global tile index
    last_real = tiles_total - 1

    def _accumulate(masked):
        diff = p_ref[...].astype(jnp.float32) - t_ref[...].astype(jnp.float32)
        av = jnp.abs(diff)
        if masked:
            # Row-threshold mask (no flat int32 index -> no overflow for any
            # realistic size): zero only the out-of-bounds overhang of the
            # final partial tile; all in-bounds data is valid by construction.
            row_idx = blk * tile_r + jax.lax.broadcasted_iota(
                jnp.int32, (tile_r, _LANES), 0)
            av = jnp.where(row_idx < rows, av, 0.0)
        # Fold (tile_r,128) -> (8,128) with pure VPU adds.
        acc_ref[...] += av.reshape(tile_r // _SUBLANES, _SUBLANES, _LANES).sum(axis=0)

    if tail_partial:
        # Mask work only on the single partial tile; every other tile is a
        # straight load + add.  Phantom tiles (blk > last_real) fall through.
        @pl.when(blk < last_real)
        def _bulk():
            _accumulate(masked=False)

        @pl.when(blk == last_real)
        def _tail():
            _accumulate(masked=True)
    elif has_phantom:
        @pl.when(blk <= last_real)
        def _real():
            _accumulate(masked=False)
    else:
        _accumulate(masked=False)

    @pl.when(t_id == n_inner - 1)
    def _finalize():
        out_ref[0] = acc_ref[...]


def l1_loss(predictions, true):
    """JAX/Pallas implementation of torch.nn.functional.l1_loss (mean)."""
    assert predictions.shape == true.shape
    n = predictions.size
    out_dtype = jnp.result_type(predictions.dtype, true.dtype)

    p_flat = jnp.ravel(predictions)
    t_flat = jnp.ravel(true)

    chunk = _SUBLANES * _LANES                      # 1024 elements
    bulk = (n // chunk) * chunk                     # lane/sublane-aligned prefix

    if bulk == 0:
        # Tiny input (< one (8,128) slab): plain JAX, not worth a kernel launch.
        return jnp.mean(jnp.abs(p_flat.astype(jnp.float32)
                                - t_flat.astype(jnp.float32))).astype(out_dtype)

    tail_sum = None
    if bulk != n:
        # Ragged tail (< 1024 elems) summed in JAX; avoids materializing padded
        # full-array copies of both inputs in HBM.
        tail_sum = jnp.sum(jnp.abs(p_flat[bulk:].astype(jnp.float32)
                                   - t_flat[bulk:].astype(jnp.float32)))
        p_flat = p_flat[:bulk]
        t_flat = t_flat[:bulk]

    rows = bulk // _LANES                           # multiple of 8
    p2d = p_flat.reshape(rows, _LANES)              # native dtype (bf16 stays bf16)
    t2d = t_flat.reshape(rows, _LANES)

    tile_r = min(_TILE_R_MAX, rows)                 # multiple of 8
    tiles_total = pl.cdiv(rows, tile_r)

    # Always 2-way outer split when there is more than one tile so both v7x
    # TensorCores each move half the HBM bytes; a harmless sequential loop on
    # 1-TC chips.  Odd tile counts produce one phantom tile: its index_map is
    # clamped in-bounds and the kernel skips its accumulation.
    n_par = 2 if tiles_total >= 2 else 1
    n_inner = pl.cdiv(tiles_total, n_par)
    has_phantom = n_par * n_inner > tiles_total
    tail_partial = (rows % tile_r) != 0
    last_blk = tiles_total - 1

    def idx_map(p, t):
        blk = p * n_inner + t
        if has_phantom:
            blk = jnp.minimum(blk, last_blk)        # keep phantom DMA in bounds
        return (blk, 0)

    kernel = functools.partial(
        _l1_sum_kernel, rows=rows, tiles_total=tiles_total, n_inner=n_inner,
        tail_partial=tail_partial, has_phantom=has_phantom)

    grid_spec = pltpu.PrefetchScalarGridSpec(
        num_scalar_prefetch=0,
        grid=(n_par, n_inner),
        in_specs=[
            pl.BlockSpec((tile_r, _LANES), idx_map),
            pl.BlockSpec((tile_r, _LANES), idx_map),
        ],
        out_specs=pl.BlockSpec((1, _SUBLANES, _LANES), lambda p, t: (p, 0, 0)),
        scratch_shapes=[pltpu.VMEM((_SUBLANES, _LANES), jnp.float32)],
    )

    partials = pl.pallas_call(
        kernel,
        out_shape=jax.ShapeDtypeStruct((n_par, _SUBLANES, _LANES), jnp.float32),
        grid_spec=grid_spec,
        compiler_params=pltpu.CompilerParams(
            dimension_semantics=("parallel", "arbitrary")),
    )(p2d, t2d)

    # Cheap JAX epilogue: final cross-lane reduction + mean over the true n.
    total = jnp.sum(partials)
    if tail_sum is not None:
        total = total + tail_sum
    return (total / jnp.float32(n)).astype(out_dtype)


if __name__ == "__main__":
    key = jax.random.PRNGKey(0)
    k1, k2 = jax.random.split(key)

    # NCHW-shaped inputs, consistent with the loss module's usage.
    shape = (2, 4, 16, 16)
    predictions = jax.random.normal(k1, shape, jnp.float32)
    true = jax.random.normal(k2, shape, jnp.float32)

    out = jax.block_until_ready(l1_loss(predictions, true))
    ref = jnp.mean(jnp.abs(predictions - true))

    assert jnp.isfinite(out), f"non-finite result: {out}"
    assert jnp.allclose(out, ref, rtol=1e-5, atol=1e-6), (out, ref)
    print("KERNEL_OK")
</pallas_src>

<mosaic_0001>
module attributes {stable_mosaic.version = 11 : i64} {
  func.func @_l1_sum_kernel(%arg0: i32, %arg1: i32, %arg2: memref<16x128xf32, #tpu.memory_space<vmem>>, %arg3: memref<16x128xf32, #tpu.memory_space<vmem>>, %arg4: memref<1x8x128xf32, #tpu.memory_space<vmem>>, %arg5: memref<8x128xf32, #tpu.memory_space<vmem>>) attributes {dimension_semantics = [#tpu.dimension_semantics<parallel>, #tpu.dimension_semantics<arbitrary>], iteration_bounds = array<i64: 1, 1>, scalar_prefetch = 0 : i64, scratch_operands = 1 : i64, tpu.core_type = #tpu.core_type<tc>, window_params = [{transform_indices = @transform_0, window_bounds = array<i64: 16, 128>}, {transform_indices = @transform_1, window_bounds = array<i64: 16, 128>}, {transform_indices = @transform_2, window_bounds = array<i64: 1, 8, 128>}]} {
    %c0_i32 = arith.constant 0 : i32
    %0 = arith.cmpi eq, %arg1, %c0_i32 : i32
    %1 = arith.extui %0 : i1 to i32
    %c0_i32_0 = arith.constant 0 : i32
    %2 = arith.cmpi ne, %1, %c0_i32_0 : i32
    scf.if %2 {
      %cst_10 = arith.constant 0.000000e+00 : f32
      %15 = vector.broadcast %cst_10 : f32 to vector<8x128xf32>
      %c0_11 = arith.constant 0 : index
      %c0_12 = arith.constant 0 : index
      %16 = vector.load %arg5[%c0_11, %c0_12] : memref<8x128xf32, #tpu.memory_space<vmem>>, vector<8x128xf32>
      tpu.vector_store %arg5[%c0_11, %c0_12], %15 {strides = array<i32>} : memref<8x128xf32, #tpu.memory_space<vmem>>, vector<8x128xf32>,
    } else {
    }
    %c0 = arith.constant 0 : index
    %c0_1 = arith.constant 0 : index
    %3 = vector.load %arg2[%c0, %c0_1] : memref<16x128xf32, #tpu.memory_space<vmem>>, vector<16x128xf32>
    %c0_2 = arith.constant 0 : index
    %c0_3 = arith.constant 0 : index
    %4 = vector.load %arg3[%c0_2, %c0_3] : memref<16x128xf32, #tpu.memory_space<vmem>>, vector<16x128xf32>
    %5 = arith.subf %3, %4 : vector<16x128xf32>
    %6 = math.absf %5 : vector<16x128xf32>
    %c0_4 = arith.constant 0 : index
    %c0_5 = arith.constant 0 : index
    %7 = vector.load %arg5[%c0_4, %c0_5] : memref<8x128xf32, #tpu.memory_space<vmem>>, vector<8x128xf32>
    %8 = vector.shape_cast %6 : vector<16x128xf32> to vector<2x8x128xf32>
    %cst = arith.constant dense<0.000000e+00> : vector<8x128xf32>
    %9 = vector.multi_reduction <add>, %8, %cst [0] : vector<2x8x128xf32> to vector<8x128xf32>
    %10 = arith.addf %7, %9 : vector<8x128xf32>
    %c0_6 = arith.constant 0 : index
    %c0_7 = arith.constant 0 : index
    %11 = vector.load %arg5[%c0_6, %c0_7] : memref<8x128xf32, #tpu.memory_space<vmem>>, vector<8x128xf32>
    tpu.vector_store %arg5[%c0_6, %c0_7], %10 {strides = array<i32>} : memref<8x128xf32, #tpu.memory_space<vmem>>, vector<8x128xf32>,
    %c0_i32_8 = arith.constant 0 : i32
    %12 = arith.cmpi eq, %arg1, %c0_i32_8 : i32
    %13 = arith.extui %12 : i1 to i32
    %c0_i32_9 = arith.constant 0 : i32
    %14 = arith.cmpi ne, %13, %c0_i32_9 : i32
    scf.if %14 {
      %c0_10 = arith.constant 0 : index
      %c0_11 = arith.constant 0 : index
      %15 = vector.load %arg5[%c0_10, %c0_11] : memref<8x128xf32, #tpu.memory_space<vmem>>, vector<8x128xf32>
      %c0_12 = arith.constant 0 : index
      %c0_13 = arith.constant 0 : index
      %c0_14 = arith.constant 0 : index
      %16 = vector.load %arg4[%c0_12, %c0_13, %c0_14] : memref<1x8x128xf32, #tpu.memory_space<vmem>>, vector<1x8x128xf32>
      %17 = vector.shape_cast %16 : vector<1x8x128xf32> to vector<8x128xf32>
      %18 = vector.shape_cast %15 : vector<8x128xf32> to vector<1x8x128xf32>
      tpu.vector_store %arg4[%c0_12, %c0_13, %c0_14], %18 {strides = array<i32>} : memref<1x8x128xf32, #tpu.memory_space<vmem>>, vector<1x8x128xf32>,
    } else {
    }
    return
  }
  func.func @transform_0(%arg0: i32, %arg1: i32) -> (i32, i32) {
    %c1_i32 = arith.constant 1 : i32
    %0 = arith.muli %arg0, %c1_i32 : i32
    %1 = arith.addi %0, %arg1 : i32
    %c0_i32 = arith.constant 0 : i32
    %c0_i32_0 = arith.constant 0 : i32
    return %1, %c0_i32 : i32, i32
  }
  func.func @transform_1(%arg0: i32, %arg1: i32) -> (i32, i32) {
    %c1_i32 = arith.constant 1 : i32
    %0 = arith.muli %arg0, %c1_i32 : i32
    %1 = arith.addi %0, %arg1 : i32
    %c0_i32 = arith.constant 0 : i32
    %c0_i32_0 = arith.constant 0 : i32
    return %1, %c0_i32 : i32, i32
  }
  func.func @transform_2(%arg0: i32, %arg1: i32) -> (i32, i32, i32) {
    %c0_i32 = arith.constant 0 : i32
    %c0_i32_0 = arith.constant 0 : i32
    %c0_i32_1 = arith.constant 0 : i32
    return %arg0, %c0_i32, %c0_i32_0 : i32, i32, i32
  }
}

</mosaic_0001>

<llo_original>
// kernel: tpu_custom_call.1
$region0: #{tpu_custom_call.1}
  #allocation0 [shape = 'u32[]', space=smem, size = 0x4, offset = 0x4, fixed_abs, tag = 'smem constant byte address 0x4 - core index']
  #allocation1 [shape = 'u32[144,128]{1,0:T(1,128)}', space=vmem, size = 0x12000, scoped, tag = 'internal scratch']
  #allocation2 [shape = 'f32[8,128]{1,0:T(8,128)}', space=vmem, size = 0x1000, scoped, tag = 'scratch operand']
  %s0 = inlined_call_operand.hbm [shape: f32[16,128], index: 0, kind: input, shape index: {}]
  %s1 = inlined_call_operand.hbm [shape: f32[16,128], index: 1, kind: input, shape index: {}]
  %s2 = inlined_call_operand.hbm [shape: f32[1,8,128], index: 2, kind: output, shape index: {}]
  %s3 = sld [smem:[#allocation0]]
  $region34: #{tpu_custom_call.1} parent=0
    _
  %s5 = ssub.s32 1, %s3
  %s6 = scalar_select 0, %s5, %s3
  $region1: #{tpu_custom_call.1} parent=0
    #allocation3 [shape = 'u8[8192]{0}', space=vmem, size = 0x2000, scoped, tag = 'input window, operand 0, single buffered']
    #allocation4 [shape = 's32[1]{0}', space=sflag, size = 0x4, scoped, tag = 'scoped memory for tpu_custom_call.1']
    #allocation5 [shape = 's32[1]{0}', space=sflag, size = 0x4, scoped, tag = 'scoped memory for tpu_custom_call.1']
    #allocation6 [shape = 'u8[8192]{0}', space=vmem, size = 0x2000, scoped, tag = 'input window, operand 1, single buffered']
    #allocation7 [shape = 's32[1]{0}', space=sflag, size = 0x4, scoped, tag = 'scoped memory for tpu_custom_call.1']
    #allocation8 [shape = 'u8[4096]{0}', space=vmem, size = 0x1000, scoped, tag = 'output window, operand 0, single buffered']
    %7 = vsyncpa [#allocation4], 0
    %8 = vsyncpa [#allocation7], 0
    %9 = vsyncpa [#allocation5], 0
    // Predicated region
    $region2: #{tpu_custom_call.1} parent=1 // pred_check
      _
    $region3: #{tpu_custom_call.1} parent=1 // pred_check_branch
      %11 = sbr.rel (0) target = $region5
    $region4: #{tpu_custom_call.1} parent=1 // pred_region
      %s12 = sadd.s32 0, 0
      %s13 = smul.u32 2, %s12
      %s15 = ssub.s32 256, 256
      %16 = vsyncadd [#allocation4], %s15
      %s17 = smul.addr %s13, 128
      %s18 = scalar_lea.hbm %s0, %s17
      %s19 = sshll.u32 [#allocation3], 4
      %s20 = int_to_ptr.vmem [resolvable:$true] %s19
      %25 = dma.hbm_to_vmem [thread:$0]  %s18, 256, %s20, [#allocation4], 128, 128, 8
    $region5: #{tpu_custom_call.1} parent=1 // pred_fallthru
      _
    // Predicated region
    $region6: #{tpu_custom_call.1} parent=1 // pred_check
      _
    $region7: #{tpu_custom_call.1} parent=1 // pred_check_branch
      %27 = sbr.rel (0) target = $region9
    $region8: #{tpu_custom_call.1} parent=1 // pred_region
      %s28 = sadd.s32 0, 0
      %s29 = smul.u32 2, %s28
      %s31 = ssub.s32 256, 256
      %32 = vsyncadd [#allocation7], %s31
      %s33 = smul.addr %s29, 128
      %s34 = scalar_lea.hbm %s1, %s33
      %s35 = sshll.u32 [#allocation6], 4
      %s36 = int_to_ptr.vmem [resolvable:$true] %s35
      %41 = dma.hbm_to_vmem [thread:$0]  %s34, 256, %s36, [#allocation7], 128, 128, 8
    $region9: #{tpu_custom_call.1} parent=1 // pred_fallthru
      _
    // Predicated region
    $region10: #{tpu_custom_call.1} parent=1 // pred_check
      _
    $region11: #{tpu_custom_call.1} parent=1 // pred_check_branch
      %43 = sbr.rel (0) target = $region13
    $region12: #{tpu_custom_call.1} parent=1 // pred_region
      %44 = dma.done [#allocation4], 256
    $region13: #{tpu_custom_call.1} parent=1 // pred_fallthru
      _
    // Predicated region
    $region14: #{tpu_custom_call.1} parent=1 // pred_check
      _
    $region15: #{tpu_custom_call.1} parent=1 // pred_check_branch
      %46 = sbr.rel (0) target = $region17
    $region16: #{tpu_custom_call.1} parent=1 // pred_region
      %47 = dma.done [#allocation7], 256
    $region17: #{tpu_custom_call.1} parent=1 // pred_fallthru
      _
    %s48 = sadd.s32 0, 0
    %s49 = smul.u32 2, %s48
    %s50 = sadd.s32 0, 0
    %s51 = smul.u32 2, %s50
    %p52 = scmp.eq.s32.totalorder 0, 0
    // Predicated region
    $region18: #{tpu_custom_call.1} parent=1 // pred_check
      %p53 = pneg %p52
    $region19: #{tpu_custom_call.1} parent=1 // pred_check_branch
      %55 = sbr.rel (%p53) target = $region21
    $region20: #{tpu_custom_call.1} parent=1 // pred_region
      %56 = vst [vmem:[#allocation2] sm:$0xff] 0.0
    $region21: #{tpu_custom_call.1} parent=1 // pred_fallthru
      _
    %v57 = vld [vmem:[#allocation3] sm:$0xff]
    %v58 = vld [vmem:[#allocation3 + $0x8] sm:$0xff]
    %v59 = vld [vmem:[#allocation6] sm:$0xff]
    %v60 = vld [vmem:[#allocation6 + $0x8] sm:$0xff]
    %v61 = vsub.f32 %v57, %v59
    %v62 = vsub.f32 %v58, %v60
    %v63 = vand.u32 2147483647, %v61
    %v64 = vand.u32 2147483647, %v62
    %v65 = vld [vmem:[#allocation2] sm:$0xff]
    %v66 = vadd.f32 %v63, %v64
    %v67 = vadd.f32 %v65, %v66
    %68 = vst [vmem:[#allocation2] sm:$0xff] %v67
    // Predicated region
    $region22: #{tpu_custom_call.1} parent=1 // pred_check
      %p69 = pneg %p52
    $region23: #{tpu_custom_call.1} parent=1 // pred_check_branch
      %71 = sbr.rel (%p69) target = $region25
    $region24: #{tpu_custom_call.1} parent=1 // pred_region
      %v72 = vld [vmem:[#allocation2] sm:$0xff]
      %73 = vst [vmem:[#allocation8] sm:$0xff] %v72
    $region25: #{tpu_custom_call.1} parent=1 // pred_fallthru
      _
    // Predicated region
    $region26: #{tpu_custom_call.1} parent=1 // pred_check
      _
    $region27: #{tpu_custom_call.1} parent=1 // pred_check_branch
      %75 = sbr.rel (0) target = $region29
    $region28: #{tpu_custom_call.1} parent=1 // pred_region
      %s77 = ssub.s32 128, 128
      %78 = vsyncadd [#allocation5], %s77
      %s80 = sshll.u32 [#allocation8], 4
      %s81 = int_to_ptr.vmem [resolvable:$true] %s80
      %83 = dma.vmem_to_hbm [thread:$0]  %s81, 128, %s2, [#allocation5]
    $region29: #{tpu_custom_call.1} parent=1 // pred_fallthru
      _
    // Predicated region
    $region30: #{tpu_custom_call.1} parent=1 // pred_check
      _
    $region31: #{tpu_custom_call.1} parent=1 // pred_check_branch
      %85 = sbr.rel (0) target = $region33
    $region32: #{tpu_custom_call.1} parent=1 // pred_region
      %86 = dma.done [#allocation5], 128
    $region33: #{tpu_custom_call.1} parent=1 // pred_fallthru
      _
    %87 = vsyncpa [#allocation4], 1
    %88 = vsyncpa [#allocation7], 1
    %89 = vsyncpa [#allocation5], 1

</llo_original>
